<compile_context>
chip_gen: v7x
topology: tpu7x:2x2x1
jax: 0.10.0
libtpu: 0.0.40
codegen_flags: <defaults>
</compile_context>

<pallas_src>
import functools

import jax
import jax.numpy as jnp
from jax.experimental import pallas as pl
from jax.experimental.pallas import tpu as pltpu

HIDDEN = 256
TILE_CAP = 512  # max rows per grid step (multiple of 8); v5e/v6e like big tiles


def _round_up(x, m):
    return ((x + m - 1) // m) * m


def _cdiv(a, b):
    return (a + b - 1) // b


def policy_kernel(action_dim, hidden, head_pad,
                  obs_ref, w1_ref, w2h_ref, b_ref, out_ref):
    # activations in bf16 for native-rate MXU; accumulate in f32
    x = obs_ref[...].astype(jnp.bfloat16)

    # statically sliced packed biases (all offsets lane-aligned multiples of 128)
    b1 = b_ref[:, 0:hidden]
    b2 = b_ref[:, hidden:2 * hidden]
    bh = b_ref[:, 2 * hidden:2 * hidden + head_pad]

    # statically sliced packed [w2 | fused head] weight slab (lane-aligned)
    w2 = w2h_ref[:, 0:hidden]
    wh = w2h_ref[:, hidden:hidden + head_pad]

    # fc1 + relu
    h1 = jnp.dot(x, w1_ref[...], preferred_element_type=jnp.float32) + b1
    h1 = jnp.maximum(h1, 0.0).astype(jnp.bfloat16)

    # fc2 + relu
    h2 = jnp.dot(h1, w2, preferred_element_type=jnp.float32) + b2
    h2 = jnp.maximum(h2, 0.0).astype(jnp.bfloat16)

    # fused [mean | log_std | zero-pad] head -> lane-dense (TB, head_pad) output
    y = jnp.dot(h2, wh, preferred_element_type=jnp.float32) + bh

    # clamp only the log_std columns (action_dim <= col < 2*action_dim);
    # single-row mask, broadcast by jnp.where
    col = jax.lax.broadcasted_iota(jnp.int32, (1, head_pad), 1)
    is_log_std = (col >= action_dim) & (col < 2 * action_dim)
    y = jnp.where(is_log_std, jnp.clip(y, -20.0, 2.0), y)

    out_ref[...] = y.astype(out_ref.dtype)


def pack_params(raw, action_dim, hidden=HIDDEN, weight_dtype=jnp.bfloat16):
    """Fuse the two head layers (zero-padded to 128 lanes), pack w2 with the
    fused head into one weight slab, pack all biases into one operand."""
    head_pad = max(128, _round_up(2 * action_dim, 128))

    wh = jnp.zeros((hidden, head_pad), jnp.float32)
    wh = wh.at[:, :action_dim].set(raw["wm"])
    wh = wh.at[:, action_dim:2 * action_dim].set(raw["ws"])

    w1 = raw["w1"].astype(weight_dtype)                              # (obs_dim, hidden)
    w2h = jnp.concatenate([raw["w2"], wh], axis=1).astype(weight_dtype)  # (hidden, hidden+head_pad)

    bh = jnp.zeros((1, head_pad), jnp.float32)
    bh = bh.at[:, :action_dim].set(raw["bm"])
    bh = bh.at[:, action_dim:2 * action_dim].set(raw["bs"])
    bias = jnp.concatenate([raw["b1"], raw["b2"], bh], axis=1)       # (1, 2*hidden+head_pad)

    return dict(w1=w1, w2h=w2h, bias=bias,
                action_dim=action_dim, hidden=hidden, head_pad=head_pad)


def _multi_tensorcore():
    """True on chips with >1 TensorCore per device (v7x, v4/v5p megacore)."""
    try:
        kind = jax.devices()[0].device_kind.lower()
    except Exception:
        return False
    if "lite" in kind or "v5e" in kind or "v6e" in kind:
        return False
    return any(tag in kind for tag in ("v7", "tpu7", "7x", "v4", "v5p"))


def _choose_tiling(B):
    """Batch-adaptive tiling: ragged padding < 8 rows/tile; >=2 grid steps on
    multi-TC chips at training-sized batches so 'parallel' shards both cores."""
    num_tiles = max(1, _cdiv(B, TILE_CAP))
    if B >= 16 and _multi_tensorcore():
        num_tiles = max(num_tiles, 2)
    TB = _round_up(_cdiv(B, num_tiles), 8)
    Bp = num_tiles * TB
    return TB, Bp, num_tiles


def policy_forward(obs, packed):
    """Fused PolicyNetwork forward. Returns (mean, log_std)."""
    B, obs_dim = obs.shape
    A = packed["action_dim"]
    head_pad = packed["head_pad"]

    TB, Bp, num_tiles = _choose_tiling(B)
    if Bp != B:
        obs = jnp.pad(obs, ((0, Bp - B), (0, 0)))

    kernel = functools.partial(policy_kernel, A, packed["hidden"], head_pad)

    out = pl.pallas_call(
        kernel,
        out_shape=jax.ShapeDtypeStruct((Bp, head_pad), jnp.float32),
        grid=(num_tiles,),
        in_specs=[
            pl.BlockSpec((TB, obs_dim), lambda i: (i, 0)),            # obs tile
            pl.BlockSpec(packed["w1"].shape, lambda i: (0, 0)),       # fc1 weight (bf16)
            pl.BlockSpec(packed["w2h"].shape, lambda i: (0, 0)),      # packed [w2|head] (bf16)
            pl.BlockSpec(packed["bias"].shape, lambda i: (0, 0)),     # packed biases (f32)
        ],
        out_specs=pl.BlockSpec((TB, head_pad), lambda i: (i, 0)),
        compiler_params=pltpu.CompilerParams(
            dimension_semantics=("parallel",)),
    )(obs, packed["w1"], packed["w2h"], packed["bias"])

    mean = out[:B, :A]
    log_std = out[:B, A:2 * A]
    return mean, log_std


def init_params(key, obs_dim, action_dim, hidden=HIDDEN):
    """PyTorch nn.Linear default init: U(-1/sqrt(fan_in), 1/sqrt(fan_in)).
    Weights stored pre-transposed as (in, out)."""
    def linear(k, fan_in, fan_out):
        kw, kb = jax.random.split(k)
        bound = 1.0 / jnp.sqrt(fan_in)
        w = jax.random.uniform(kw, (fan_in, fan_out), jnp.float32, -bound, bound)
        b = jax.random.uniform(kb, (1, fan_out), jnp.float32, -bound, bound)
        return w, b

    k1, k2, k3, k4 = jax.random.split(key, 4)
    w1, b1 = linear(k1, obs_dim, hidden)
    w2, b2 = linear(k2, hidden, hidden)
    wm, bm = linear(k3, hidden, action_dim)
    ws, bs = linear(k4, hidden, action_dim)
    return dict(w1=w1, b1=b1, w2=w2, b2=b2, wm=wm, bm=bm, ws=ws, bs=bs)


def reference_forward_f32(obs, p):
    """Full-f32 PyTorch-semantics reference (loose check vs bf16 kernel)."""
    h1 = jnp.maximum(obs @ p["w1"] + p["b1"], 0.0)
    h2 = jnp.maximum(h1 @ p["w2"] + p["b2"], 0.0)
    mean = h2 @ p["wm"] + p["bm"]
    log_std = jnp.clip(h2 @ p["ws"] + p["bs"], -20.0, 2.0)
    return mean, log_std


def reference_forward_matched(obs, packed):
    """Pure-JAX reference mirroring the kernel's bf16-weight / f32-accumulate
    numerics (same packed weights, same casts)."""
    A = packed["action_dim"]
    hidden = packed["hidden"]
    w1 = packed["w1"]
    w2 = packed["w2h"][:, :hidden]
    wh = packed["w2h"][:, hidden:]
    b1 = packed["bias"][:, :hidden]
    b2 = packed["bias"][:, hidden:2 * hidden]
    bh = packed["bias"][:, 2 * hidden:]

    x = obs.astype(jnp.bfloat16)
    h1 = jnp.maximum(jnp.dot(x, w1, preferred_element_type=jnp.float32) + b1, 0.0)
    h1 = h1.astype(jnp.bfloat16)
    h2 = jnp.maximum(jnp.dot(h1, w2, preferred_element_type=jnp.float32) + b2, 0.0)
    h2 = h2.astype(jnp.bfloat16)
    y = jnp.dot(h2, wh, preferred_element_type=jnp.float32) + bh
    mean = y[:, :A]
    log_std = jnp.clip(y[:, A:2 * A], -20.0, 2.0)
    return mean, log_std


if __name__ == "__main__":
    # CartPole-v1: obs_dim = 4, action_dim = 1 (as in the reference script)
    obs_dim, action_dim = 4, 1

    key = jax.random.PRNGKey(0)
    k_params, k_obs1, k_obs2 = jax.random.split(key, 3)
    raw = init_params(k_params, obs_dim, action_dim)
    packed = pack_params(raw, action_dim)

    # case 1: tiny inference batch (single 8-row block)
    obs_small = jax.random.normal(k_obs1, (8, obs_dim), jnp.float32)
    mean_s, log_std_s = policy_forward(obs_small, packed)
    jax.block_until_ready((mean_s, log_std_s))
    m_ref_s, s_ref_s = reference_forward_matched(obs_small, packed)
    assert mean_s.shape == (8, action_dim) and log_std_s.shape == (8, action_dim)
    assert jnp.allclose(mean_s, m_ref_s, atol=1e-4, rtol=1e-4), "mean mismatch (B=8)"
    assert jnp.allclose(log_std_s, s_ref_s, atol=1e-4, rtol=1e-4), "log_std mismatch (B=8)"
    # sanity vs full-f32 reference (bf16-weight tolerance band)
    m_f32, s_f32 = reference_forward_f32(obs_small, raw)
    assert jnp.allclose(mean_s, m_f32, atol=5e-2, rtol=5e-2), "mean far from f32 ref"
    assert jnp.allclose(log_std_s, s_f32, atol=5e-2, rtol=5e-2), "log_std far from f32 ref"

    # case 2: ragged training-size batch (adaptive tiling; pads < 8 rows/tile)
    obs_big = jax.random.normal(k_obs2, (300, obs_dim), jnp.float32)
    mean_b, log_std_b = policy_forward(obs_big, packed)
    jax.block_until_ready((mean_b, log_std_b))
    m_ref_b, s_ref_b = reference_forward_matched(obs_big, packed)
    assert mean_b.shape == (300, action_dim) and log_std_b.shape == (300, action_dim)
    assert jnp.allclose(mean_b, m_ref_b, atol=1e-4, rtol=1e-4), "mean mismatch (B=300)"
    assert jnp.allclose(log_std_b, s_ref_b, atol=1e-4, rtol=1e-4), "log_std mismatch (B=300)"

    print("KERNEL_OK")
</pallas_src>

<mosaic_0001>
module attributes {stable_mosaic.version = 11 : i64} {
  func.func @policy_kernel(%arg0: i32, %arg1: memref<8x4xf32, #tpu.memory_space<vmem>>, %arg2: memref<4x256xbf16, #tpu.memory_space<vmem>>, %arg3: memref<256x384xbf16, #tpu.memory_space<vmem>>, %arg4: memref<1x640xf32, #tpu.memory_space<vmem>>, %arg5: memref<8x128xf32, #tpu.memory_space<vmem>>) attributes {dimension_semantics = [#tpu.dimension_semantics<parallel>], iteration_bounds = array<i64: 1>, scalar_prefetch = 0 : i64, scratch_operands = 0 : i64, tpu.core_type = #tpu.core_type<tc>, window_params = [{transform_indices = @transform_0, window_bounds = array<i64: 8, 4>}, {pipeline_mode = #tpu.pipeline_mode<synchronous>, transform_indices = @transform_1, window_bounds = array<i64: 4, 256>}, {pipeline_mode = #tpu.pipeline_mode<synchronous>, transform_indices = @transform_2, window_bounds = array<i64: 256, 384>}, {pipeline_mode = #tpu.pipeline_mode<synchronous>, transform_indices = @transform_3, window_bounds = array<i64: 1, 640>}, {transform_indices = @transform_4, window_bounds = array<i64: 8, 128>}]} {
    %c0 = arith.constant 0 : index
    %c0_0 = arith.constant 0 : index
    %0 = vector.load %arg1[%c0, %c0_0] : memref<8x4xf32, #tpu.memory_space<vmem>>, vector<8x4xf32>
    %1 = arith.truncf %0 : vector<8x4xf32> to vector<8x4xbf16>
    %c0_1 = arith.constant 0 : index
    %c0_2 = arith.constant 0 : index
    %2 = vector.load %arg4[%c0_1, %c0_2] : memref<1x640xf32, #tpu.memory_space<vmem>>, vector<1x256xf32>
    %c0_3 = arith.constant 0 : index
    %c256 = arith.constant 256 : index
    %3 = vector.load %arg4[%c0_3, %c256] : memref<1x640xf32, #tpu.memory_space<vmem>>, vector<1x256xf32>
    %c0_4 = arith.constant 0 : index
    %c512 = arith.constant 512 : index
    %4 = vector.load %arg4[%c0_4, %c512] : memref<1x640xf32, #tpu.memory_space<vmem>>, vector<1x128xf32>
    %c0_5 = arith.constant 0 : index
    %c0_6 = arith.constant 0 : index
    %5 = vector.load %arg3[%c0_5, %c0_6] : memref<256x384xbf16, #tpu.memory_space<vmem>>, vector<256x256xbf16>
    %c0_7 = arith.constant 0 : index
    %c256_8 = arith.constant 256 : index
    %6 = vector.load %arg3[%c0_7, %c256_8] : memref<256x384xbf16, #tpu.memory_space<vmem>>, vector<256x128xbf16>
    %c0_9 = arith.constant 0 : index
    %c0_10 = arith.constant 0 : index
    %7 = vector.load %arg2[%c0_9, %c0_10] : memref<4x256xbf16, #tpu.memory_space<vmem>>, vector<4x256xbf16>
    %cst = arith.constant dense<0.000000e+00> : vector<8x256xf32>
    %8 = tpu.matmul %1, %7, %cst {dimension_numbers = #tpu.dot_dimension_numbers<[1], [0], [0], [1], [0, 0, 1, 1], [], []>} : vector<8x4xbf16>, vector<4x256xbf16>, vector<8x256xf32> -> vector<8x256xf32>
    %9 = vector.broadcast %2 : vector<1x256xf32> to vector<8x256xf32>
    %10 = arith.addf %8, %9 : vector<8x256xf32>
    %cst_11 = arith.constant 0.000000e+00 : f32
    %11 = vector.broadcast %cst_11 : f32 to vector<8x256xf32>
    %12 = arith.maximumf %10, %11 : vector<8x256xf32>
    %13 = arith.truncf %12 : vector<8x256xf32> to vector<8x256xbf16>
    %cst_12 = arith.constant dense<0.000000e+00> : vector<8x256xf32>
    %14 = tpu.matmul %13, %5, %cst_12 {dimension_numbers = #tpu.dot_dimension_numbers<[1], [0], [0], [1], [0, 0, 1, 1], [], []>} : vector<8x256xbf16>, vector<256x256xbf16>, vector<8x256xf32> -> vector<8x256xf32>
    %15 = vector.broadcast %3 : vector<1x256xf32> to vector<8x256xf32>
    %16 = arith.addf %14, %15 : vector<8x256xf32>
    %cst_13 = arith.constant 0.000000e+00 : f32
    %17 = vector.broadcast %cst_13 : f32 to vector<8x256xf32>
    %18 = arith.maximumf %16, %17 : vector<8x256xf32>
    %19 = arith.truncf %18 : vector<8x256xf32> to vector<8x256xbf16>
    %cst_14 = arith.constant dense<0.000000e+00> : vector<8x128xf32>
    %20 = tpu.matmul %19, %6, %cst_14 {dimension_numbers = #tpu.dot_dimension_numbers<[1], [0], [0], [1], [0, 0, 1, 1], [], []>} : vector<8x256xbf16>, vector<256x128xbf16>, vector<8x128xf32> -> vector<8x128xf32>
    %21 = vector.broadcast %4 : vector<1x128xf32> to vector<8x128xf32>
    %22 = arith.addf %20, %21 : vector<8x128xf32>
    %23 = tpu.iota {dimensions = array<i32: 1>} : vector<1x128xi32>
    %c1_i32 = arith.constant 1 : i32
    %24 = vector.broadcast %c1_i32 : i32 to vector<1x128xi32>
    %25 = arith.cmpi sge, %23, %24 : vector<1x128xi32>
    %c2_i32 = arith.constant 2 : i32
    %26 = vector.broadcast %c2_i32 : i32 to vector<1x128xi32>
    %27 = arith.cmpi slt, %23, %26 : vector<1x128xi32>
    %28 = arith.andi %25, %27 : vector<1x128xi1>
    %cst_15 = arith.constant -2.000000e+01 : f32
    %cst_16 = arith.constant 2.000000e+00 : f32
    %29 = vector.broadcast %cst_15 : f32 to vector<8x128xf32>
    %30 = arith.maximumf %29, %22 : vector<8x128xf32>
    %31 = vector.broadcast %cst_16 : f32 to vector<8x128xf32>
    %32 = arith.minimumf %31, %30 : vector<8x128xf32>
    %33 = vector.shape_cast %28 : vector<1x128xi1> to vector<1x128xi1>
    %34 = vector.broadcast %33 : vector<1x128xi1> to vector<8x128xi1>
    %35 = arith.select %34, %32, %22 : vector<8x128xi1>, vector<8x128xf32>
    %c0_17 = arith.constant 0 : index
    %c0_18 = arith.constant 0 : index
    %36 = vector.load %arg5[%c0_17, %c0_18] : memref<8x128xf32, #tpu.memory_space<vmem>>, vector<8x128xf32>
    tpu.vector_store %arg5[%c0_17, %c0_18], %35 {strides = array<i32>} : memref<8x128xf32, #tpu.memory_space<vmem>>, vector<8x128xf32>,
    return
  }
  func.func @transform_0(%arg0: i32) -> (i32, i32) {
    %c0_i32 = arith.constant 0 : i32
    %c0_i32_0 = arith.constant 0 : i32
    return %arg0, %c0_i32 : i32, i32
  }
  func.func @transform_1(%arg0: i32) -> (i32, i32) {
    %c0_i32 = arith.constant 0 : i32
    %c0_i32_0 = arith.constant 0 : i32
    %c0_i32_1 = arith.constant 0 : i32
    return %c0_i32, %c0_i32_0 : i32, i32
  }
  func.func @transform_2(%arg0: i32) -> (i32, i32) {
    %c0_i32 = arith.constant 0 : i32
    %c0_i32_0 = arith.constant 0 : i32
    %c0_i32_1 = arith.constant 0 : i32
    return %c0_i32, %c0_i32_0 : i32, i32
  }
  func.func @transform_3(%arg0: i32) -> (i32, i32) {
    %c0_i32 = arith.constant 0 : i32
    %c0_i32_0 = arith.constant 0 : i32
    %c0_i32_1 = arith.constant 0 : i32
    return %c0_i32, %c0_i32_0 : i32, i32
  }
  func.func @transform_4(%arg0: i32) -> (i32, i32) {
    %c0_i32 = arith.constant 0 : i32
    %c0_i32_0 = arith.constant 0 : i32
    return %arg0, %c0_i32 : i32, i32
  }
}

</mosaic_0001>

<llo_original>
// kernel: tpu_custom_call.1
$region0: #{tpu_custom_call.1}
  #allocation0 [shape = 'u32[]', space=smem, size = 0x4, offset = 0x4, fixed_abs, tag = 'smem constant byte address 0x4 - core index']
  #allocation1 [shape = 'u32[144,128]{1,0:T(1,128)}', space=vmem, size = 0x12000, scoped, tag = 'internal scratch']
  %s0 = inlined_call_operand.vmem [shape: f32[8,4], index: 0, kind: input, shape index: {}]
  %s1 = inlined_call_operand.vmem [shape: bf16[4,256], index: 1, kind: input, shape index: {}]
  %s2 = inlined_call_operand.hbm [shape: bf16[256,384], index: 2, kind: input, shape index: {}]
  %s3 = inlined_call_operand.vmem [shape: f32[1,640], index: 3, kind: input, shape index: {}]
  %s4 = inlined_call_operand.hbm [shape: f32[8,128], index: 4, kind: output, shape index: {}]
  %s5 = sld [smem:[#allocation0]]
  $region30: #{tpu_custom_call.1} parent=0
    _
  %s7 = ssub.s32 1, %s5
  %s8 = scalar_select 0, %s7, %s5
  $region1: #{tpu_custom_call.1} parent=0
    #allocation2 [shape = 'u8[196608]{0}', space=vmem, size = 0x30000, scoped, tag = 'input window, operand 2, single buffered']
    #allocation3 [shape = 's32[1]{0}', space=sflag, size = 0x4, scoped, tag = 'scoped memory for tpu_custom_call.1']
    #allocation4 [shape = 's32[1]{0}', space=sflag, size = 0x4, scoped, tag = 'scoped memory for tpu_custom_call.1']
    #allocation5 [shape = 'u8[4096]{0}', space=vmem, size = 0x1000, scoped, tag = 'output window, operand 0, single buffered']
    %9 = vsyncpa [#allocation3], 0
    %10 = vsyncpa [#allocation4], 0
    // Predicated region
    $region2: #{tpu_custom_call.1} parent=1 // pred_check
      _
    $region3: #{tpu_custom_call.1} parent=1 // pred_check_branch
      %12 = sbr.rel (0) target = $region5
    $region4: #{tpu_custom_call.1} parent=1 // pred_region
      _
    $region5: #{tpu_custom_call.1} parent=1 // pred_fallthru
      _
    // Predicated region
    $region6: #{tpu_custom_call.1} parent=1 // pred_check
      _
    $region7: #{tpu_custom_call.1} parent=1 // pred_check_branch
      %14 = sbr.rel (0) target = $region9
    $region8: #{tpu_custom_call.1} parent=1 // pred_region
      _
    $region9: #{tpu_custom_call.1} parent=1 // pred_fallthru
      _
    // Predicated region
    $region10: #{tpu_custom_call.1} parent=1 // pred_check
      _
    $region11: #{tpu_custom_call.1} parent=1 // pred_check_branch
      %16 = sbr.rel (0) target = $region13
    $region12: #{tpu_custom_call.1} parent=1 // pred_region
      %s18 = ssub.s32 6144, 6144
      %19 = vsyncadd [#allocation3], %s18
      %s20 = sshll.u32 [#allocation2], 4
      %s21 = int_to_ptr.vmem [resolvable:$true] %s20
      %26 = dma.hbm_to_vmem [thread:$0]  %s2, 6144, %s21, [#allocation3], 192, 192, 12
    $region13: #{tpu_custom_call.1} parent=1 // pred_fallthru
      _
    // Predicated region
    $region14: #{tpu_custom_call.1} parent=1 // pred_check
      _
    $region15: #{tpu_custom_call.1} parent=1 // pred_check_branch
      %28 = sbr.rel (0) target = $region17
    $region16: #{tpu_custom_call.1} parent=1 // pred_region
      _
    $region17: #{tpu_custom_call.1} parent=1 // pred_fallthru
      _
    // Predicated region
    $region18: #{tpu_custom_call.1} parent=1 // pred_check
      _
    $region19: #{tpu_custom_call.1} parent=1 // pred_check_branch
      %30 = sbr.rel (0) target = $region21
    $region20: #{tpu_custom_call.1} parent=1 // pred_region
      %31 = dma.done [#allocation3], 6144
    $region21: #{tpu_custom_call.1} parent=1 // pred_fallthru
      _
    %v33 = vld [vmem:[%s0] sm:$0xff]
    %v34 = vpack.c.bf16 %v33, %v33
    %v35 = vld [vmem:[%s3] sm:$0x3]
    %v36 = vld [vmem:[%s3 + $0x2] sm:$0x3]
    %v37 = vld [vmem:[%s3 + $0x4] sm:$0x1]
    %v38 = vld [vmem:[#allocation2] sm:$0xff]
    %v39 = vld [vmem:[#allocation2 + $0xc] sm:$0xff]
    %v40 = vld [vmem:[#allocation2 + $0x18] sm:$0xff]
    %v41 = vld [vmem:[#allocation2 + $0x24] sm:$0xff]
    %v42 = vld [vmem:[#allocation2 + $0x30] sm:$0xff]
    %v43 = vld [vmem:[#allocation2 + $0x3c] sm:$0xff]
    %v44 = vld [vmem:[#allocation2 + $0x48] sm:$0xff]
    %v45 = vld [vmem:[#allocation2 + $0x54] sm:$0xff]
    %v46 = vld [vmem:[#allocation2 + $0x60] sm:$0xff]
    %v47 = vld [vmem:[#allocation2 + $0x6c] sm:$0xff]
    %v48 = vld [vmem:[#allocation2 + $0x78] sm:$0xff]
    %v49 = vld [vmem:[#allocation2 + $0x84] sm:$0xff]
    %v50 = vld [vmem:[#allocation2 + $0x90] sm:$0xff]
    %v51 = vld [vmem:[#allocation2 + $0x9c] sm:$0xff]
    %v52 = vld [vmem:[#allocation2 + $0xa8] sm:$0xff]
    %v53 = vld [vmem:[#allocation2 + $0xb4] sm:$0xff]
    %v54 = vld [vmem:[#allocation2 + $0xc0] sm:$0xff]
    %v55 = vld [vmem:[#allocation2 + $0xcc] sm:$0xff]
    %v56 = vld [vmem:[#allocation2 + $0xd8] sm:$0xff]
    %v57 = vld [vmem:[#allocation2 + $0xe4] sm:$0xff]
    %v58 = vld [vmem:[#allocation2 + $0xf0] sm:$0xff]
    %v59 = vld [vmem:[#allocation2 + $0xfc] sm:$0xff]
    %v60 = vld [vmem:[#allocation2 + $0x108] sm:$0xff]
    %v61 = vld [vmem:[#allocation2 + $0x114] sm:$0xff]
    %v62 = vld [vmem:[#allocation2 + $0x120] sm:$0xff]
    %v63 = vld [vmem:[#allocation2 + $0x12c] sm:$0xff]
    %v64 = vld [vmem:[#allocation2 + $0x138] sm:$0xff]
    %v65 = vld [vmem:[#allocation2 + $0x144] sm:$0xff]
    %v66 = vld [vmem:[#allocation2 + $0x150] sm:$0xff]
    %v67 = vld [vmem:[#allocation2 + $0x15c] sm:$0xff]
    %v68 = vld [vmem:[#allocation2 + $0x168] sm:$0xff]
    %v69 = vld [vmem:[#allocation2 + $0x174] sm:$0xff]
    %v70 = vld [vmem:[#allocation2 + $0x8] sm:$0xf]
    %v71 = vld [vmem:[#allocation2 + $0x14] sm:$0xf]
    %v72 = vld [vmem:[#allocation2 + $0x20] sm:$0xf]
    %v73 = vld [vmem:[#allocation2 + $0x2c] sm:$0xf]
    %v74 = vld [vmem:[#allocation2 + $0x38] sm:$0xf]
    %v75 = vld [vmem:[#allocation2 + $0x44] sm:$0xf]
    %v76 = vld [vmem:[#allocation2 + $0x50] sm:$0xf]
    %v77 = vld [vmem:[#allocation2 + $0x5c] sm:$0xf]
    %v78 = vld [vmem:[#allocation2 + $0x68] sm:$0xf]
    %v79 = vld [vmem:[#allocation2 + $0x74] sm:$0xf]
    %v80 = vld [vmem:[#allocation2 + $0x80] sm:$0xf]
    %v81 = vld [vmem:[#allocation2 + $0x8c] sm:$0xf]
    %v82 = vld [vmem:[#allocation2 + $0x98] sm:$0xf]
    %v83 = vld [vmem:[#allocation2 + $0xa4] sm:$0xf]
    %v84 = vld [vmem:[#allocation2 + $0xb0] sm:$0xf]
    %v85 = vld [vmem:[#allocation2 + $0xbc] sm:$0xf]
    %v86 = vld [vmem:[#allocation2 + $0xc8] sm:$0xf]
    %v87 = vld [vmem:[#allocation2 + $0xd4] sm:$0xf]
    %v88 = vld [vmem:[#allocation2 + $0xe0] sm:$0xf]
    %v89 = vld [vmem:[#allocation2 + $0xec] sm:$0xf]
    %v90 = vld [vmem:[#allocation2 + $0xf8] sm:$0xf]
    %v91 = vld [vmem:[#allocation2 + $0x104] sm:$0xf]
    %v92 = vld [vmem:[#allocation2 + $0x110] sm:$0xf]
    %v93 = vld [vmem:[#allocation2 + $0x11c] sm:$0xf]
    %v94 = vld [vmem:[#allocation2 + $0x128] sm:$0xf]
    %v95 = vld [vmem:[#allocation2 + $0x134] sm:$0xf]
    %v96 = vld [vmem:[#allocation2 + $0x140] sm:$0xf]
    %v97 = vld [vmem:[#allocation2 + $0x14c] sm:$0xf]
    %v98 = vld [vmem:[#allocation2 + $0x158] sm:$0xf]
    %v99 = vld [vmem:[#allocation2 + $0x164] sm:$0xf]
    %v100 = vld [vmem:[#allocation2 + $0x170] sm:$0xf]
    %v101 = vld [vmem:[#allocation2 + $0x17c] sm:$0xf]
    %v102 = vld [vmem:[%s1] sm:$0xf]
    %v104 = vlaneseq
    %v105 = vshrl.u32 %v104, 7
    %v106 = vsub.s32 0, %v105
    %v107 = vrot.slane %v35, %v106
    %v108 = vlaneseq
    %v109 = vshrl.u32 %v108, 7
    %v110 = vsub.s32 1, %v109
    %v111 = vrot.slane %v35, %v110
    %v116 = vunpack.c.l.s4 1983009808
    %v117 = vunpack.c.0.s8 %v116
    %v118 = vlaneseq
    %v119 = vshrl.u32 %v118, 7
    %v120 = vsub.s32 %v117, %v119
    %v121 = vrot.slane %v102, %v120
    %v122 = vcombine.high %v121, %v121
    %vm123 = vcmask 31744
    %v125 = vsel %vm123, %v34, 0
    %vm127 = vcmask 1041408
    %v129 = vsel %vm127, %v121, 0
    %v132 = vsel %vm127, %v122, 0
    %134 = vmatprep.subr.bf16.mxu0 %v132
    %135 = vmatpush1.bf16.msra.mxu0 %v129
    %136 = vmatprep.subr.bf16.mxu0 0
    %137 = vmatpush1.bf16.msra.mxu0 0
    %138 = vmatprep.subr.bf16.mxu0 0
    %139 = vmatpush1.bf16.msra.mxu0 0
    %140 = vmatprep.subr.bf16.mxu0 0
    %141 = vmatpush1.bf16.msra.mxu0 0
    %142 = vmatprep.subr.bf16.mxu0 0
    %143 = vmatpush1.bf16.msra.mxu0 0
    %144 = vmatprep.subr.bf16.mxu0 0
    %145 = vmatpush1.bf16.msra.mxu0 0
    %146 = vmatprep.subr.bf16.mxu0 0
    %147 = vmatpush1.bf16.msra.mxu0 0
    %148 = vmatprep.subr.bf16.mxu0 0
    %149 = vmatpush1.bf16.msra.mxu0 0
    %150 = vmatprep.subr.bf16.mxu0 0
    %151 = vmatpush1.bf16.msra.mxu0 0
    %152 = vmatprep.subr.bf16.mxu0 0
    %153 = vmatpush1.bf16.msra.mxu0 0
    %154 = vmatprep.subr.bf16.mxu0 0
    %155 = vmatpush1.bf16.msra.mxu0 0
    %156 = vmatprep.subr.bf16.mxu0 0
    %157 = vmatpush1.bf16.msra.mxu0 0
    %158 = vmatprep.subr.bf16.mxu0 0
    %159 = vmatpush1.bf16.msra.mxu0 0
    %160 = vmatprep.subr.bf16.mxu0 0
    %161 = vmatpush1.bf16.msra.mxu0 0
    %162 = vmatprep.subr.bf16.mxu0 0
    %163 = vmatpush1.bf16.msra.mxu0 0
    %164 = vmatprep.subr.bf16.mxu0 0
    %165 = vmatpush1.bf16.msra.mxu0 0
    %166 = vmatprep.mubr.bf16.mxu0 0
    %167 = vmatmul.mubr.bf16.gmra.mrb[0].mxu0 %v125
    %v168 = vpop.f32.mrb[0].mxu0
    %v169 = vadd.f32 %v107, %v168
    %v170 = vpop.f32.mrb[0].mxu0
    %v171 = vadd.f32 %v111, %v170
    %v172 = vpop.f32.mrb[0].mxu0
    %v173 = vpop.f32.mrb[0].mxu0
    %174 = vdwg.mxu0
    %v175 = vmax.f32 %v169, 0.0
    %v176 = vmax.f32 %v171, 0.0
    %v177 = vpack.c.bf16 %v175, %v175
    %v178 = vpack.c.bf16 %v176, %v176
    %v180 = vlaneseq
    %v181 = vshrl.u32 %v180, 7
    %v182 = vsub.s32 0, %v181
    %v183 = vrot.slane %v36, %v182
    %v184 = vlaneseq
    %v185 = vshrl.u32 %v184, 7
    %v186 = vsub.s32 1, %v185
    %v187 = vrot.slane %v36, %v186
    %v222 = vunpack.c.l.b16 %v38
    %v223 = vunpack.c.h.b16 %v38
    %v224 = vunpack.c.l.b16 %v39
    %v225 = vunpack.c.h.b16 %v39
    %v226 = vunpack.c.l.b16 %v40
    %v227 = vunpack.c.h.b16 %v40
    %v228 = vunpack.c.l.b16 %v41
    %v229 = vunpack.c.h.b16 %v41
    %v230 = vunpack.c.l.b16 %v42
    %v231 = vunpack.c.h.b16 %v42
    %v232 = vunpack.c.l.b16 %v43
    %v233 = vunpack.c.h.b16 %v43
    %v234 = vunpack.c.l.b16 %v44
    %v235 = vunpack.c.h.b16 %v44
    %v236 = vunpack.c.l.b16 %v45
    %v237 = vunpack.c.h.b16 %v45
    %v238 = vunpack.c.l.b16 %v46
    %v239 = vunpack.c.h.b16 %v46
    %v240 = vunpack.c.l.b16 %v47
    %v241 = vunpack.c.h.b16 %v47
    %v242 = vunpack.c.l.b16 %v48
    %v243 = vunpack.c.h.b16 %v48
    %v244 = vunpack.c.l.b16 %v49
    %v245 = vunpack.c.h.b16 %v49
    %v246 = vunpack.c.l.b16 %v50
    %v247 = vunpack.c.h.b16 %v50
    %v248 = vunpack.c.l.b16 %v51
    %v249 = vunpack.c.h.b16 %v51
    %v250 = vunpack.c.l.b16 %v52
    %v251 = vunpack.c.h.b16 %v52
    %v252 = vunpack.c.l.b16 %v53
    %v253 = vunpack.c.h.b16 %v53
    %v254 = vunpack.c.l.b16 %v54
    %v255 = vunpack.c.h.b16 %v54
    %v256 = vunpack.c.l.b16 %v55
    %v257 = vunpack.c.h.b16 %v55
    %v258 = vunpack.c.l.b16 %v56
    %v259 = vunpack.c.h.b16 %v56
    %v260 = vunpack.c.l.b16 %v57
    %v261 = vunpack.c.h.b16 %v57
    %v262 = vunpack.c.l.b16 %v58
    %v263 = vunpack.c.h.b16 %v58
    %v264 = vunpack.c.l.b16 %v59
    %v265 = vunpack.c.h.b16 %v59
    %v266 = vunpack.c.l.b16 %v60
    %v267 = vunpack.c.h.b16 %v60
    %v268 = vunpack.c.l.b16 %v61
    %v269 = vunpack.c.h.b16 %v61
    %v270 = vunpack.c.l.b16 %v62
    %v271 = vunpack.c.h.b16 %v62
    %v272 = vunpack.c.l.b16 %v63
    %v273 = vunpack.c.h.b16 %v63
    %v274 = vunpack.c.l.b16 %v64
    %v275 = vunpack.c.h.b16 %v64
    %v276 = vunpack.c.l.b16 %v65
    %v277 = vunpack.c.h.b16 %v65
    %v278 = vunpack.c.l.b16 %v66
    %v279 = vunpack.c.h.b16 %v66
    %v280 = vunpack.c.l.b16 %v67
    %v281 = vunpack.c.h.b16 %v67
    %v282 = vunpack.c.l.b16 %v68
    %v283 = vunpack.c.h.b16 %v68
    %v284 = vunpack.c.l.b16 %v69
    %v285 = vunpack.c.h.b16 %v69
    %v286 = vpack.c.b16 %v224, %v222
    %v287 = vpack.c.b16 %v225, %v223
    %v288 = vpack.c.b16 %v228, %v226
    %v289 = vpack.c.b16 %v229, %v227
    %v290 = vpack.c.b16 %v232, %v230
    %v291 = vpack.c.b16 %v233, %v231
    %v292 = vpack.c.b16 %v236, %v234
    %v293 = vpack.c.b16 %v237, %v235
    %v294 = vpack.c.b16 %v240, %v238
    %v295 = vpack.c.b16 %v241, %v239
    %v296 = vpack.c.b16 %v244, %v242
    %v297 = vpack.c.b16 %v245, %v243
    %v298 = vpack.c.b16 %v248, %v246
    %v299 = vpack.c.b16 %v249, %v247
    %v300 = vpack.c.b16 %v252, %v250
    %v301 = vpack.c.b16 %v253, %v251
    %v302 = vpack.c.b16 %v256, %v254
    %v303 = vpack.c.b16 %v257, %v255
    %v304 = vpack.c.b16 %v260, %v258
    %v305 = vpack.c.b16 %v261, %v259
    %v306 = vpack.c.b16 %v264, %v262
    %v307 = vpack.c.b16 %v265, %v263
    %v308 = vpack.c.b16 %v268, %v266
    %v309 = vpack.c.b16 %v269, %v267
    %v310 = vpack.c.b16 %v272, %v270
    %v311 = vpack.c.b16 %v273, %v271
    %v312 = vpack.c.b16 %v276, %v274
    %v313 = vpack.c.b16 %v277, %v275
    %v314 = vpack.c.b16 %v280, %v278
    %v315 = vpack.c.b16 %v281, %v279
    %v316 = vpack.c.b16 %v284, %v282
    %v317 = vpack.c.b16 %v285, %v283
    %350 = vmatprep.subr.bf16.mxu0 %v287
    %351 = vmatpush1.bf16.msra.mxu0 %v286
    %352 = vmatprep.subr.bf16.mxu0 %v289
    %353 = vmatpush1.bf16.msra.mxu0 %v288
    %354 = vmatprep.subr.bf16.mxu0 %v291
    %355 = vmatpush1.bf16.msra.mxu0 %v290
    %356 = vmatprep.subr.bf16.mxu0 %v293
    %357 = vmatpush1.bf16.msra.mxu0 %v292
    %358 = vmatprep.subr.bf16.mxu0 %v295
    %359 = vmatpush1.bf16.msra.mxu0 %v294
    %360 = vmatprep.subr.bf16.mxu0 %v297
    %361 = vmatpush1.bf16.msra.mxu0 %v296
    %362 = vmatprep.subr.bf16.mxu0 %v299
    %363 = vmatpush1.bf16.msra.mxu0 %v298
    %364 = vmatprep.subr.bf16.mxu0 %v301
    %365 = vmatpush1.bf16.msra.mxu0 %v300
    %366 = vmatprep.subr.bf16.mxu0 %v303
    %367 = vmatpush1.bf16.msra.mxu0 %v302
    %368 = vmatprep.subr.bf16.mxu0 %v305
    %369 = vmatpush1.bf16.msra.mxu0 %v304
    %370 = vmatprep.subr.bf16.mxu0 %v307
    %371 = vmatpush1.bf16.msra.mxu0 %v306
    %372 = vmatprep.subr.bf16.mxu0 %v309
    %373 = vmatpush1.bf16.msra.mxu0 %v308
    %374 = vmatprep.subr.bf16.mxu0 %v311
    %375 = vmatpush1.bf16.msra.mxu0 %v310
    %376 = vmatprep.subr.bf16.mxu0 %v313
    %377 = vmatpush1.bf16.msra.mxu0 %v312
    %378 = vmatprep.subr.bf16.mxu0 %v315
    %379 = vmatpush1.bf16.msra.mxu0 %v314
    %380 = vmatprep.subr.bf16.mxu0 %v317
    %381 = vmatpush1.bf16.msra.mxu0 %v316
    %382 = vmatprep.mubr.bf16.mxu0 %v178
    %383 = vmatmul.mubr.bf16.gmra.mrb[0].mxu0 %v177
    %v384 = vpop.f32.mrb[0].mxu0
    %v385 = vadd.f32 %v183, %v384
    %v386 = vpop.f32.mrb[0].mxu0
    %v387 = vadd.f32 %v187, %v386
    %v388 = vpop.f32.mrb[0].mxu0
    %v389 = vpop.f32.mrb[0].mxu0
    %390 = vdwg.mxu0
    %v391 = vmax.f32 %v385, 0.0
    %v392 = vmax.f32 %v387, 0.0
    %v393 = vpack.c.bf16 %v391, %v391
    %v394 = vpack.c.bf16 %v392, %v392
    %v396 = vlaneseq
    %v397 = vshrl.u32 %v396, 7
    %v398 = vsub.s32 0, %v397
    %v399 = vrot.slane %v37, %v398
    %v433 = vunpack.c.l.b16 %v70
    %v434 = vunpack.c.l.b16 %v71
    %v435 = vunpack.c.l.b16 %v72
    %v436 = vunpack.c.l.b16 %v73
    %v437 = vunpack.c.l.b16 %v74
    %v438 = vunpack.c.l.b16 %v75
    %v439 = vunpack.c.l.b16 %v76
    %v440 = vunpack.c.l.b16 %v77
    %v441 = vunpack.c.l.b16 %v78
    %v442 = vunpack.c.l.b16 %v79
    %v443 = vunpack.c.l.b16 %v80
    %v444 = vunpack.c.l.b16 %v81
    %v445 = vunpack.c.l.b16 %v82
    %v446 = vunpack.c.l.b16 %v83
    %v447 = vunpack.c.l.b16 %v84
    %v448 = vunpack.c.l.b16 %v85
    %v449 = vunpack.c.l.b16 %v86
    %v450 = vunpack.c.l.b16 %v87
    %v451 = vunpack.c.l.b16 %v88
    %v452 = vunpack.c.l.b16 %v89
    %v453 = vunpack.c.l.b16 %v90
    %v454 = vunpack.c.l.b16 %v91
    %v455 = vunpack.c.l.b16 %v92
    %v456 = vunpack.c.l.b16 %v93
    %v457 = vunpack.c.l.b16 %v94
    %v458 = vunpack.c.l.b16 %v95
    %v459 = vunpack.c.l.b16 %v96
    %v460 = vunpack.c.l.b16 %v97
    %v461 = vunpack.c.l.b16 %v98
    %v462 = vunpack.c.l.b16 %v99
    %v463 = vunpack.c.l.b16 %v100
    %v464 = vunpack.c.l.b16 %v101
    %v465 = vpack.c.b16 %v434, %v433
    %v466 = vpack.c.b16 %v436, %v435
    %v467 = vpack.c.b16 %v438, %v437
    %v468 = vpack.c.b16 %v440, %v439
    %v469 = vpack.c.b16 %v442, %v441
    %v470 = vpack.c.b16 %v444, %v443
    %v471 = vpack.c.b16 %v446, %v445
    %v472 = vpack.c.b16 %v448, %v447
    %v473 = vpack.c.b16 %v450, %v449
    %v474 = vpack.c.b16 %v452, %v451
    %v475 = vpack.c.b16 %v454, %v453
    %v476 = vpack.c.b16 %v456, %v455
    %v477 = vpack.c.b16 %v458, %v457
    %v478 = vpack.c.b16 %v460, %v459
    %v479 = vpack.c.b16 %v462, %v461
    %v480 = vpack.c.b16 %v464, %v463
    %497 = vmatprep.subr.bf16.mxu0 0
    %498 = vmatpush1.bf16.msra.mxu0 %v465
    %499 = vmatprep.subr.bf16.mxu0 0
    %500 = vmatpush1.bf16.msra.mxu0 %v466
    %501 = vmatprep.subr.bf16.mxu0 0
    %502 = vmatpush1.bf16.msra.mxu0 %v467
    %503 = vmatprep.subr.bf16.mxu0 0
    %504 = vmatpush1.bf16.msra.mxu0 %v468
    %505 = vmatprep.subr.bf16.mxu0 0
    %506 = vmatpush1.bf16.msra.mxu0 %v469
    %507 = vmatprep.subr.bf16.mxu0 0
    %508 = vmatpush1.bf16.msra.mxu0 %v470
    %509 = vmatprep.subr.bf16.mxu0 0
    %510 = vmatpush1.bf16.msra.mxu0 %v471
    %511 = vmatprep.subr.bf16.mxu0 0
    %512 = vmatpush1.bf16.msra.mxu0 %v472
    %513 = vmatprep.subr.bf16.mxu0 0
    %514 = vmatpush1.bf16.msra.mxu0 %v473
    %515 = vmatprep.subr.bf16.mxu0 0
    %516 = vmatpush1.bf16.msra.mxu0 %v474
    %517 = vmatprep.subr.bf16.mxu0 0
    %518 = vmatpush1.bf16.msra.mxu0 %v475
    %519 = vmatprep.subr.bf16.mxu0 0
    %520 = vmatpush1.bf16.msra.mxu0 %v476
    %521 = vmatprep.subr.bf16.mxu0 0
    %522 = vmatpush1.bf16.msra.mxu0 %v477
    %523 = vmatprep.subr.bf16.mxu0 0
    %524 = vmatpush1.bf16.msra.mxu0 %v478
    %525 = vmatprep.subr.bf16.mxu0 0
    %526 = vmatpush1.bf16.msra.mxu0 %v479
    %527 = vmatprep.subr.bf16.mxu0 0
    %528 = vmatpush1.bf16.msra.mxu0 %v480
    %529 = vmatprep.mubr.bf16.mxu0 %v394
    %530 = vmatmul.mubr.bf16.gmra.mrb[0].mxu0 %v393
    %v531 = vpop.f32.mrb[0].mxu0
    %v532 = vadd.f32 %v399, %v531
    %v533 = vpop.f32.mrb[0].mxu0
    %v534 = vpop.f32.mrb[0].mxu0
    %v535 = vpop.f32.mrb[0].mxu0
    %536 = vdwg.mxu0
    %v537 = vlaneseq
    %v538 = vand.u32 %v537, 127
    %vm539 = vcmp.ge.s32.totalorder %v538, 1
    %vm540 = vcmp.lt.s32.totalorder %v538, 2
    %vm541 = vmand %vm539, %vm540
    %v542 = vmax.f32 %v532, -20.0
    %v543 = vmin.f32 %v542, 2.0
    %v544 = vsel %vm541, 1, 0
    %vm545 = vcmp.eq.s32.totalorder %v544, 1
    %v546 = vsel %vm545, %v543, %v532
    %547 = vst [vmem:[#allocation5] sm:$0xff] %v546
    // Predicated region
    $region22: #{tpu_custom_call.1} parent=1 // pred_check
      _
    $region23: #{tpu_custom_call.1} parent=1 // pred_check_branch
      %549 = sbr.rel (0) target = $region25
    $region24: #{tpu_custom_call.1} parent=1 // pred_region
      %s551 = ssub.s32 128, 128
      %552 = vsyncadd [#allocation4], %s551
      %s554 = sshll.u32 [#allocation5], 4
      %s555 = int_to_ptr.vmem [resolvable:$true] %s554
      %557 = dma.vmem_to_hbm [thread:$0]  %s555, 128, %s4, [#allocation4]
    $region25: #{tpu_custom_call.1} parent=1 // pred_fallthru
      _
    // Predicated region
    $region26: #{tpu_custom_call.1} parent=1 // pred_check
      _
    $region27: #{tpu_custom_call.1} parent=1 // pred_check_branch
      %559 = sbr.rel (0) target = $region29
    $region28: #{tpu_custom_call.1} parent=1 // pred_region
      %560 = dma.done [#allocation4], 128
    $region29: #{tpu_custom_call.1} parent=1 // pred_fallthru
      _
    %561 = vsyncpa [#allocation3], 1
    %562 = vsyncpa [#allocation4], 1

</llo_original>
